<compile_context>
chip_gen: v6e
topology: v6e:2x2x1
jax: 0.10.0
libtpu: 0.0.40
codegen_flags: <defaults>
</compile_context>

<pallas_src>
import functools

import jax
import jax.numpy as jnp
from jax import lax
from jax.experimental import pallas as pl
from jax.experimental.pallas import tpu as pltpu


def _attn_dropout_kernel(qkv_ref, bits_ref, o_ref, *, scale, threshold,
                         use_dropout):
    # qkv_ref: (3, Cb, S, S) fused Q/K/V block; bits_ref: (Cb, S, S) uint32.
    q = qkv_ref[0]          # (Cb, S, S)
    k = qkv_ref[1]
    v = qkv_ref[2]

    # s_t[c] = K_c @ Q_c  ==  (Q_c^T @ K_c^T)^T   (batched over channels)
    s_t = lax.dot_general(
        k, q,
        dimension_numbers=(((2,), (1,)), ((0,), (0,))),
        preferred_element_type=jnp.float32)

    if use_dropout:
        # Integer-domain dropout: keep element iff bits >= round(p * 2^32).
        keep = bits_ref[...] >= jnp.uint32(threshold)
        s_t = jnp.where(keep, s_t, 0.0)

    # Single fused scalar: (1/sqrt(embedding)) * (1/(1-p))  (just 1/sqrt(e) at p=0)
    a = s_t * jnp.float32(scale)

    # out[c] = V_c^T @ a[c]  ==  (dropout(Q_c^T K_c^T / sqrt(e)) @ V_c)^T
    out = lax.dot_general(
        v, a,
        dimension_numbers=(((1,), (1,)), ((0,), (0,))),
        preferred_element_type=jnp.float32)
    o_ref[...] = out.astype(o_ref.dtype)


def _pick_channel_block(C, S, itemsize, budget_bytes=8 * 1024 * 1024):
    """Largest divisor of C whose per-step VMEM footprint fits the budget."""
    # Double-buffered qkv(3)+out(1) tiles + u32 bits, plus ~3 f32 intermediates.
    per_ch = 2 * (4 * S * S * itemsize + S * S * 4) + 3 * S * S * 4
    cb = max(1, min(C, budget_bytes // max(per_ch, 1)))
    while C % cb:
        cb -= 1
    return cb


def model_forward(x, num_heads, embedding, dropout_p=0.1, key=None):
    """x: (B, C, H, W) with B >= 3 and H == W. Returns (1, C, S, S)."""
    del num_heads  # unused by the torch module's forward
    B, C, H, W = x.shape
    assert B >= 3 and H == W, "module requires batch >= 3 and square spatial dims"
    S = H
    dropout_p = float(dropout_p)
    assert 0.0 <= dropout_p < 1.0, "dropout_p must be in [0, 1)"

    # Fused Q/K/V slab: batch samples 0/1/2 -> (3, C, S, S), one input array.
    qkv = x[:3]

    inv_scale = 1.0 / (float(embedding) ** 0.5)
    use_dropout = dropout_p > 0.0
    if use_dropout:
        if key is None:
            key = jax.random.PRNGKey(0)
        bits = jax.random.bits(key, (C, S, S), dtype=jnp.uint32)
        threshold = int(round(dropout_p * (2.0 ** 32)))
        scale = inv_scale / (1.0 - dropout_p)
    else:
        bits = jnp.zeros((C, S, S), dtype=jnp.uint32)
        threshold = 0
        scale = inv_scale

    Cb = _pick_channel_block(C, S, jnp.dtype(x.dtype).itemsize)
    kernel = functools.partial(_attn_dropout_kernel, scale=scale,
                               threshold=threshold, use_dropout=use_dropout)

    out = pl.pallas_call(
        kernel,
        out_shape=jax.ShapeDtypeStruct((C, S, S), x.dtype),
        grid=(C // Cb,),
        in_specs=[
            pl.BlockSpec((3, Cb, S, S), lambda i: (0, i, 0, 0)),
            pl.BlockSpec((Cb, S, S), lambda i: (i, 0, 0)),
        ],
        out_specs=pl.BlockSpec((Cb, S, S), lambda i: (i, 0, 0)),
        compiler_params=pltpu.CompilerParams(
            dimension_semantics=("parallel",)),
    )(qkv, bits)

    return out[None]  # (1, C, S, S)


if __name__ == "__main__":
    key = jax.random.PRNGKey(0)
    # Small shapes consistent with the module: batch=4 (>=3), channels=3, spatial=16.
    B, C, S = 4, 3, 16
    x = jax.random.normal(key, (B, C, S, S), dtype=jnp.float32)

    num_heads = 4
    embedding = S

    # 1) Deterministic check (dropout disabled) against a pure-JAX reference of
    #    the exact torch math, to validate the transpose-free formulation.
    out0 = jax.block_until_ready(model_forward(x, num_heads, embedding,
                                               dropout_p=0.0))
    q, k, v = x[0], x[1], x[2]
    scaled = jnp.einsum('cmi,cjm->cij', q, k) / (float(embedding) ** 0.5)
    prod = jnp.einsum('cim,cmj->cij', scaled, v)
    ref = jnp.transpose(prod, (0, 2, 1))[None]
    assert out0.shape == ref.shape == (1, C, S, S)
    assert bool(jnp.allclose(out0, ref, atol=1e-4, rtol=1e-4))

    # 2) Training-mode run with dropout p=0.1 (module's forward semantics).
    out = jax.block_until_ready(model_forward(x, num_heads, embedding,
                                              dropout_p=0.1,
                                              key=jax.random.PRNGKey(1)))
    assert out.shape == (1, C, S, S), out.shape
    assert bool(jnp.all(jnp.isfinite(out)))
    print("KERNEL_OK")
</pallas_src>

<mosaic_0001>
module attributes {stable_mosaic.version = 11 : i64} {
  func.func @_attn_dropout_kernel(%arg0: i32, %arg1: memref<3x3x16x16xf32, #tpu.memory_space<vmem>>, %arg2: memref<3x16x16xi32, #tpu.memory_space<vmem>>, %arg3: memref<3x16x16xf32, #tpu.memory_space<vmem>>) attributes {dimension_semantics = [#tpu.dimension_semantics<parallel>], iteration_bounds = array<i64: 1>, scalar_prefetch = 0 : i64, scratch_operands = 0 : i64, tpu.core_type = #tpu.core_type<tc>, window_params = [{transform_indices = @transform_0, window_bounds = array<i64: 3, 3, 16, 16>}, {transform_indices = @transform_1, window_bounds = array<i64: 3, 16, 16>}, {transform_indices = @transform_2, window_bounds = array<i64: 3, 16, 16>}]} {
    %c0 = arith.constant 0 : index
    %c0_0 = arith.constant 0 : index
    %c0_1 = arith.constant 0 : index
    %c0_2 = arith.constant 0 : index
    %0 = vector.load %arg1[%c0, %c0_0, %c0_1, %c0_2] : memref<3x3x16x16xf32, #tpu.memory_space<vmem>>, vector<1x3x16x16xf32>
    %1 = vector.shape_cast %0 : vector<1x3x16x16xf32> to vector<3x16x16xf32>
    %c1 = arith.constant 1 : index
    %c0_3 = arith.constant 0 : index
    %c0_4 = arith.constant 0 : index
    %c0_5 = arith.constant 0 : index
    %2 = vector.load %arg1[%c1, %c0_3, %c0_4, %c0_5] : memref<3x3x16x16xf32, #tpu.memory_space<vmem>>, vector<1x3x16x16xf32>
    %3 = vector.shape_cast %2 : vector<1x3x16x16xf32> to vector<3x16x16xf32>
    %c2 = arith.constant 2 : index
    %c0_6 = arith.constant 0 : index
    %c0_7 = arith.constant 0 : index
    %c0_8 = arith.constant 0 : index
    %4 = vector.load %arg1[%c2, %c0_6, %c0_7, %c0_8] : memref<3x3x16x16xf32, #tpu.memory_space<vmem>>, vector<1x3x16x16xf32>
    %5 = vector.shape_cast %4 : vector<1x3x16x16xf32> to vector<3x16x16xf32>
    %cst = arith.constant dense<0.000000e+00> : vector<3x16x16xf32>
    %6 = tpu.matmul %3, %1, %cst {dimension_numbers = #tpu.dot_dimension_numbers<[2], [1], [1], [2], [0, 0, 0, 1, 1, 2], [0], [0]>} : vector<3x16x16xf32>, vector<3x16x16xf32>, vector<3x16x16xf32> -> vector<3x16x16xf32>
    %cst_9 = arith.constant 2.500000e-01 : f32
    %7 = vector.broadcast %cst_9 : f32 to vector<3x16x16xf32>
    %8 = arith.mulf %6, %7 : vector<3x16x16xf32>
    %cst_10 = arith.constant dense<0.000000e+00> : vector<3x16x16xf32>
    %9 = tpu.matmul %5, %8, %cst_10 {dimension_numbers = #tpu.dot_dimension_numbers<[1], [1], [2], [2], [0, 0, 0, 2, 1, 2], [0], [0]>} : vector<3x16x16xf32>, vector<3x16x16xf32>, vector<3x16x16xf32> -> vector<3x16x16xf32>
    %c0_11 = arith.constant 0 : index
    %c0_12 = arith.constant 0 : index
    %c0_13 = arith.constant 0 : index
    %10 = vector.load %arg3[%c0_11, %c0_12, %c0_13] : memref<3x16x16xf32, #tpu.memory_space<vmem>>, vector<3x16x16xf32>
    tpu.vector_store %arg3[%c0_11, %c0_12, %c0_13], %9 {strides = array<i32>} : memref<3x16x16xf32, #tpu.memory_space<vmem>>, vector<3x16x16xf32>,
    return
  }
  func.func @transform_0(%arg0: i32) -> (i32, i32, i32, i32) {
    %c0_i32 = arith.constant 0 : i32
    %c0_i32_0 = arith.constant 0 : i32
    %c0_i32_1 = arith.constant 0 : i32
    %c0_i32_2 = arith.constant 0 : i32
    return %c0_i32, %arg0, %c0_i32_0, %c0_i32_1 : i32, i32, i32, i32
  }
  func.func @transform_1(%arg0: i32) -> (i32, i32, i32) {
    %c0_i32 = arith.constant 0 : i32
    %c0_i32_0 = arith.constant 0 : i32
    %c0_i32_1 = arith.constant 0 : i32
    return %arg0, %c0_i32, %c0_i32_0 : i32, i32, i32
  }
  func.func @transform_2(%arg0: i32) -> (i32, i32, i32) {
    %c0_i32 = arith.constant 0 : i32
    %c0_i32_0 = arith.constant 0 : i32
    %c0_i32_1 = arith.constant 0 : i32
    return %arg0, %c0_i32, %c0_i32_0 : i32, i32, i32
  }
}

</mosaic_0001>

<llo_original>
// kernel: tpu_custom_call.1
$region0: #{tpu_custom_call.1}
  #allocation0 [shape = 'u32[]', space=smem, size = 0x4, offset = 0x4, fixed_abs, tag = 'smem constant byte address 0x4 - core index']
  #allocation1 [shape = 'u32[144,128]{1,0:T(1,128)}', space=vmem, size = 0x12000, scoped, tag = 'internal scratch']
  %s0 = inlined_call_operand.hbm [shape: f32[3,3,16,16], index: 0, kind: input, shape index: {}]
  %s1 = inlined_call_operand.hbm [shape: u32[3,16,16], index: 1, kind: input, shape index: {}]
  %s2 = inlined_call_operand.hbm [shape: f32[3,16,16], index: 2, kind: output, shape index: {}]
  %s3 = sld [smem:[#allocation0]]
  $region26: #{tpu_custom_call.1} parent=0
    _
  %s5 = ssub.s32 1, %s3
  %s6 = scalar_select 0, %s5, %s3
  $region1: #{tpu_custom_call.1} parent=0
    #allocation2 [shape = 'u8[73728]{0}', space=vmem, size = 0x12000, scoped, tag = 'input window, operand 0, single buffered']
    #allocation3 [shape = 's32[1]{0}', space=sflag, size = 0x4, scoped, tag = 'scoped memory for tpu_custom_call.1']
    #allocation4 [shape = 's32[1]{0}', space=sflag, size = 0x4, scoped, tag = 'scoped memory for tpu_custom_call.1']
    #allocation5 [shape = 'u8[24576]{0}', space=vmem, size = 0x6000, scoped, tag = 'input window, operand 1, single buffered']
    #allocation6 [shape = 's32[1]{0}', space=sflag, size = 0x4, scoped, tag = 'scoped memory for tpu_custom_call.1']
    #allocation7 [shape = 'u8[24576]{0}', space=vmem, size = 0x6000, scoped, tag = 'output window, operand 0, single buffered']
    %7 = vsyncpa [#allocation3], 0
    %8 = vsyncpa [#allocation6], 0
    %9 = vsyncpa [#allocation4], 0
    // Predicated region
    $region2: #{tpu_custom_call.1} parent=1 // pred_check
      _
    $region3: #{tpu_custom_call.1} parent=1 // pred_check_branch
      %11 = sbr.rel (0) target = $region5
    $region4: #{tpu_custom_call.1} parent=1 // pred_region
      %s13 = ssub.s32 2304, 2304
      %14 = vsyncadd [#allocation3], %s13
      %s15 = sshll.u32 [#allocation2], 4
      %s16 = int_to_ptr.vmem [resolvable:$true] %s15
      %21 = dma.hbm_to_vmem [thread:$0]  %s0, 2304, %s16, [#allocation3], 128, 128, 8
    $region5: #{tpu_custom_call.1} parent=1 // pred_fallthru
      _
    // Predicated region
    $region6: #{tpu_custom_call.1} parent=1 // pred_check
      _
    $region7: #{tpu_custom_call.1} parent=1 // pred_check_branch
      %23 = sbr.rel (0) target = $region9
    $region8: #{tpu_custom_call.1} parent=1 // pred_region
      %s25 = ssub.s32 768, 768
      %26 = vsyncadd [#allocation6], %s25
      %s27 = sshll.u32 [#allocation5], 4
      %s28 = int_to_ptr.vmem [resolvable:$true] %s27
      %33 = dma.hbm_to_vmem [thread:$0]  %s1, 768, %s28, [#allocation6], 128, 128, 8
    $region9: #{tpu_custom_call.1} parent=1 // pred_fallthru
      _
    // Predicated region
    $region10: #{tpu_custom_call.1} parent=1 // pred_check
      _
    $region11: #{tpu_custom_call.1} parent=1 // pred_check_branch
      %35 = sbr.rel (0) target = $region13
    $region12: #{tpu_custom_call.1} parent=1 // pred_region
      %36 = dma.done [#allocation3], 2304
    $region13: #{tpu_custom_call.1} parent=1 // pred_fallthru
      _
    // Predicated region
    $region14: #{tpu_custom_call.1} parent=1 // pred_check
      _
    $region15: #{tpu_custom_call.1} parent=1 // pred_check_branch
      %38 = sbr.rel (0) target = $region17
    $region16: #{tpu_custom_call.1} parent=1 // pred_region
      %39 = dma.done [#allocation6], 768
    $region17: #{tpu_custom_call.1} parent=1 // pred_fallthru
      _
    %v40 = vld [vmem:[#allocation2] sm:$0xff]
    %v41 = vld [vmem:[#allocation2 + $0x8] sm:$0xff]
    %v42 = vld [vmem:[#allocation2 + $0x10] sm:$0xff]
    %v43 = vld [vmem:[#allocation2 + $0x18] sm:$0xff]
    %v44 = vld [vmem:[#allocation2 + $0x20] sm:$0xff]
    %v45 = vld [vmem:[#allocation2 + $0x28] sm:$0xff]
    %s46 = scalar_lea.vmem [#allocation2], 48
    %v47 = vld [vmem:[%s46] sm:$0xff]
    %v48 = vld [vmem:[%s46 + $0x8] sm:$0xff]
    %v49 = vld [vmem:[%s46 + $0x10] sm:$0xff]
    %v50 = vld [vmem:[%s46 + $0x18] sm:$0xff]
    %v51 = vld [vmem:[%s46 + $0x20] sm:$0xff]
    %v52 = vld [vmem:[%s46 + $0x28] sm:$0xff]
    %s53 = scalar_lea.vmem [#allocation2], 96
    %v54 = vld [vmem:[%s53] sm:$0xff]
    %v55 = vld [vmem:[%s53 + $0x8] sm:$0xff]
    %v56 = vld [vmem:[%s53 + $0x10] sm:$0xff]
    %v57 = vld [vmem:[%s53 + $0x18] sm:$0xff]
    %v58 = vld [vmem:[%s53 + $0x20] sm:$0xff]
    %v59 = vld [vmem:[%s53 + $0x28] sm:$0xff]
    %vm60 = vcmask 130048
    %v62 = vsel %vm60, %v47, 0
    %v65 = vsel %vm60, %v48, 0
    %67 = vmatprep.subr.mxu0 0.0
    %68 = vmatpush1.msra.mxu0 0.0
    %69 = vmatprep.subr.mxu0 0.0
    %70 = vmatpush1.msra.mxu0 0.0
    %71 = vmatprep.subr.mxu0 0.0
    %72 = vmatpush1.msra.mxu0 0.0
    %73 = vmatprep.subr.mxu0 0.0
    %74 = vmatpush1.msra.mxu0 0.0
    %75 = vmatprep.subr.mxu0 0.0
    %76 = vmatpush1.msra.mxu0 0.0
    %77 = vmatprep.subr.mxu0 0.0
    %78 = vmatpush1.msra.mxu0 0.0
    %79 = vmatprep.subr.mxu0 0.0
    %80 = vmatpush1.msra.mxu0 0.0
    %81 = vmatprep.subr.mxu0 0.0
    %82 = vmatpush1.msra.mxu0 0.0
    %83 = vmatprep.subr.mxu0 0.0
    %84 = vmatpush1.msra.mxu0 0.0
    %85 = vmatprep.subr.mxu0 0.0
    %86 = vmatpush1.msra.mxu0 0.0
    %87 = vmatprep.subr.mxu0 0.0
    %88 = vmatpush1.msra.mxu0 0.0
    %89 = vmatprep.subr.mxu0 0.0
    %90 = vmatpush1.msra.mxu0 0.0
    %91 = vmatprep.subr.mxu0 0.0
    %92 = vmatpush1.msra.mxu0 0.0
    %93 = vmatprep.subr.mxu0 0.0
    %94 = vmatpush1.msra.mxu0 0.0
    %95 = vmatprep.subr.mxu0 0.0
    %96 = vmatpush1.msra.mxu0 %v41
    %97 = vmatprep.subr.mxu0 0.0
    %98 = vmatpush1.msra.mxu0 %v40
    %99 = vmatprep.subr.mxu0 0.0
    %100 = vmatpush2.msra.mxu0 0.0
    %101 = vmatprep.subr.mxu0 0.0
    %102 = vmatpush2.msra.mxu0 0.0
    %103 = vmatprep.subr.mxu0 0.0
    %104 = vmatpush2.msra.mxu0 0.0
    %105 = vmatprep.subr.mxu0 0.0
    %106 = vmatpush2.msra.mxu0 0.0
    %107 = vmatprep.subr.mxu0 0.0
    %108 = vmatpush2.msra.mxu0 0.0
    %109 = vmatprep.subr.mxu0 0.0
    %110 = vmatpush2.msra.mxu0 0.0
    %111 = vmatprep.subr.mxu0 0.0
    %112 = vmatpush2.msra.mxu0 0.0
    %113 = vmatprep.subr.mxu0 0.0
    %114 = vmatpush2.msra.mxu0 0.0
    %115 = vmatprep.subr.mxu0 0.0
    %116 = vmatpush2.msra.mxu0 0.0
    %117 = vmatprep.subr.mxu0 0.0
    %118 = vmatpush2.msra.mxu0 0.0
    %119 = vmatprep.subr.mxu0 0.0
    %120 = vmatpush2.msra.mxu0 0.0
    %121 = vmatprep.subr.mxu0 0.0
    %122 = vmatpush2.msra.mxu0 0.0
    %123 = vmatprep.subr.mxu0 0.0
    %124 = vmatpush2.msra.mxu0 0.0
    %125 = vmatprep.subr.mxu0 0.0
    %126 = vmatpush2.msra.mxu0 0.0
    %127 = vmatprep.subr.mxu0 0.0
    %128 = vmatpush2.msra.mxu0 0.0
    %129 = vmatprep.subr.mxu0 0.0
    %130 = vmatpush2.msra.mxu0 0.0
    %131 = vmatprep.mubr.f32.mxu0 0.0
    %132 = vmatmul.mubr.f32.gmra.mxu0 %v62
    %v133 = vpop.f32.mrf.mxu0
    %v134 = vadd.f32 0.0, %v133
    %v135 = vpop.f32.mrf.mxu0
    %136 = vmatprep.mubr.f32.mxu0 0.0
    %137 = vmatmul.mubr.f32.gmra.mxu0 %v65
    %v138 = vpop.f32.mrf.mxu0
    %v139 = vadd.f32 0.0, %v138
    %v140 = vpop.f32.mrf.mxu0
    %141 = vdwg.mxu0
    %v143 = vsel %vm60, %v49, 0
    %v146 = vsel %vm60, %v50, 0
    %148 = vmatprep.subr.mxu0 0.0
    %149 = vmatpush1.msra.mxu0 0.0
    %150 = vmatprep.subr.mxu0 0.0
    %151 = vmatpush1.msra.mxu0 0.0
    %152 = vmatprep.subr.mxu0 0.0
    %153 = vmatpush1.msra.mxu0 0.0
    %154 = vmatprep.subr.mxu0 0.0
    %155 = vmatpush1.msra.mxu0 0.0
    %156 = vmatprep.subr.mxu0 0.0
    %157 = vmatpush1.msra.mxu0 0.0
    %158 = vmatprep.subr.mxu0 0.0
    %159 = vmatpush1.msra.mxu0 0.0
    %160 = vmatprep.subr.mxu0 0.0
    %161 = vmatpush1.msra.mxu0 0.0
    %162 = vmatprep.subr.mxu0 0.0
    %163 = vmatpush1.msra.mxu0 0.0
    %164 = vmatprep.subr.mxu0 0.0
    %165 = vmatpush1.msra.mxu0 0.0
    %166 = vmatprep.subr.mxu0 0.0
    %167 = vmatpush1.msra.mxu0 0.0
    %168 = vmatprep.subr.mxu0 0.0
    %169 = vmatpush1.msra.mxu0 0.0
    %170 = vmatprep.subr.mxu0 0.0
    %171 = vmatpush1.msra.mxu0 0.0
    %172 = vmatprep.subr.mxu0 0.0
    %173 = vmatpush1.msra.mxu0 0.0
    %174 = vmatprep.subr.mxu0 0.0
    %175 = vmatpush1.msra.mxu0 0.0
    %176 = vmatprep.subr.mxu0 0.0
    %177 = vmatpush1.msra.mxu0 %v43
    %178 = vmatprep.subr.mxu0 0.0
    %179 = vmatpush1.msra.mxu0 %v42
    %180 = vmatprep.subr.mxu0 0.0
    %181 = vmatpush2.msra.mxu0 0.0
    %182 = vmatprep.subr.mxu0 0.0
    %183 = vmatpush2.msra.mxu0 0.0
    %184 = vmatprep.subr.mxu0 0.0
    %185 = vmatpush2.msra.mxu0 0.0
    %186 = vmatprep.subr.mxu0 0.0
    %187 = vmatpush2.msra.mxu0 0.0
    %188 = vmatprep.subr.mxu0 0.0
    %189 = vmatpush2.msra.mxu0 0.0
    %190 = vmatprep.subr.mxu0 0.0
    %191 = vmatpush2.msra.mxu0 0.0
    %192 = vmatprep.subr.mxu0 0.0
    %193 = vmatpush2.msra.mxu0 0.0
    %194 = vmatprep.subr.mxu0 0.0
    %195 = vmatpush2.msra.mxu0 0.0
    %196 = vmatprep.subr.mxu0 0.0
    %197 = vmatpush2.msra.mxu0 0.0
    %198 = vmatprep.subr.mxu0 0.0
    %199 = vmatpush2.msra.mxu0 0.0
    %200 = vmatprep.subr.mxu0 0.0
    %201 = vmatpush2.msra.mxu0 0.0
    %202 = vmatprep.subr.mxu0 0.0
    %203 = vmatpush2.msra.mxu0 0.0
    %204 = vmatprep.subr.mxu0 0.0
    %205 = vmatpush2.msra.mxu0 0.0
    %206 = vmatprep.subr.mxu0 0.0
    %207 = vmatpush2.msra.mxu0 0.0
    %208 = vmatprep.subr.mxu0 0.0
    %209 = vmatpush2.msra.mxu0 0.0
    %210 = vmatprep.subr.mxu0 0.0
    %211 = vmatpush2.msra.mxu0 0.0
    %212 = vmatprep.mubr.f32.mxu0 0.0
    %213 = vmatmul.mubr.f32.gmra.mxu0 %v143
    %v214 = vpop.f32.mrf.mxu0
    %v215 = vadd.f32 0.0, %v214
    %v216 = vpop.f32.mrf.mxu0
    %217 = vmatprep.mubr.f32.mxu0 0.0
    %218 = vmatmul.mubr.f32.gmra.mxu0 %v146
    %v219 = vpop.f32.mrf.mxu0
    %v220 = vadd.f32 0.0, %v219
    %v221 = vpop.f32.mrf.mxu0
    %222 = vdwg.mxu0
    %v224 = vsel %vm60, %v51, 0
    %v227 = vsel %vm60, %v52, 0
    %229 = vmatprep.subr.mxu0 0.0
    %230 = vmatpush1.msra.mxu0 0.0
    %231 = vmatprep.subr.mxu0 0.0
    %232 = vmatpush1.msra.mxu0 0.0
    %233 = vmatprep.subr.mxu0 0.0
    %234 = vmatpush1.msra.mxu0 0.0
    %235 = vmatprep.subr.mxu0 0.0
    %236 = vmatpush1.msra.mxu0 0.0
    %237 = vmatprep.subr.mxu0 0.0
    %238 = vmatpush1.msra.mxu0 0.0
    %239 = vmatprep.subr.mxu0 0.0
    %240 = vmatpush1.msra.mxu0 0.0
    %241 = vmatprep.subr.mxu0 0.0
    %242 = vmatpush1.msra.mxu0 0.0
    %243 = vmatprep.subr.mxu0 0.0
    %244 = vmatpush1.msra.mxu0 0.0
    %245 = vmatprep.subr.mxu0 0.0
    %246 = vmatpush1.msra.mxu0 0.0
    %247 = vmatprep.subr.mxu0 0.0
    %248 = vmatpush1.msra.mxu0 0.0
    %249 = vmatprep.subr.mxu0 0.0
    %250 = vmatpush1.msra.mxu0 0.0
    %251 = vmatprep.subr.mxu0 0.0
    %252 = vmatpush1.msra.mxu0 0.0
    %253 = vmatprep.subr.mxu0 0.0
    %254 = vmatpush1.msra.mxu0 0.0
    %255 = vmatprep.subr.mxu0 0.0
    %256 = vmatpush1.msra.mxu0 0.0
    %257 = vmatprep.subr.mxu0 0.0
    %258 = vmatpush1.msra.mxu0 %v45
    %259 = vmatprep.subr.mxu0 0.0
    %260 = vmatpush1.msra.mxu0 %v44
    %261 = vmatprep.subr.mxu0 0.0
    %262 = vmatpush2.msra.mxu0 0.0
    %263 = vmatprep.subr.mxu0 0.0
    %264 = vmatpush2.msra.mxu0 0.0
    %265 = vmatprep.subr.mxu0 0.0
    %266 = vmatpush2.msra.mxu0 0.0
    %267 = vmatprep.subr.mxu0 0.0
    %268 = vmatpush2.msra.mxu0 0.0
    %269 = vmatprep.subr.mxu0 0.0
    %270 = vmatpush2.msra.mxu0 0.0
    %271 = vmatprep.subr.mxu0 0.0
    %272 = vmatpush2.msra.mxu0 0.0
    %273 = vmatprep.subr.mxu0 0.0
    %274 = vmatpush2.msra.mxu0 0.0
    %275 = vmatprep.subr.mxu0 0.0
    %276 = vmatpush2.msra.mxu0 0.0
    %277 = vmatprep.subr.mxu0 0.0
    %278 = vmatpush2.msra.mxu0 0.0
    %279 = vmatprep.subr.mxu0 0.0
    %280 = vmatpush2.msra.mxu0 0.0
    %281 = vmatprep.subr.mxu0 0.0
    %282 = vmatpush2.msra.mxu0 0.0
    %283 = vmatprep.subr.mxu0 0.0
    %284 = vmatpush2.msra.mxu0 0.0
    %285 = vmatprep.subr.mxu0 0.0
    %286 = vmatpush2.msra.mxu0 0.0
    %287 = vmatprep.subr.mxu0 0.0
    %288 = vmatpush2.msra.mxu0 0.0
    %289 = vmatprep.subr.mxu0 0.0
    %290 = vmatpush2.msra.mxu0 0.0
    %291 = vmatprep.subr.mxu0 0.0
    %292 = vmatpush2.msra.mxu0 0.0
    %293 = vmatprep.mubr.f32.mxu0 0.0
    %294 = vmatmul.mubr.f32.gmra.mxu0 %v224
    %v295 = vpop.f32.mrf.mxu0
    %v296 = vadd.f32 0.0, %v295
    %v297 = vpop.f32.mrf.mxu0
    %298 = vmatprep.mubr.f32.mxu0 0.0
    %299 = vmatmul.mubr.f32.gmra.mxu0 %v227
    %v300 = vpop.f32.mrf.mxu0
    %v301 = vadd.f32 0.0, %v300
    %v302 = vpop.f32.mrf.mxu0
    %303 = vdwg.mxu0
    %v304 = vmul.f32 %v134, 0.25
    %v305 = vmul.f32 %v139, 0.25
    %v306 = vmul.f32 %v215, 0.25
    %v307 = vmul.f32 %v220, 0.25
    %v308 = vmul.f32 %v296, 0.25
    %v309 = vmul.f32 %v301, 0.25
    %310 = vxpose.xlu0.b32.start [1/16] %v54, 128
    %311 = vxpose.xlu0.b32.cont [2/16] %v55, 128
    %312 = vxpose.xlu0.b32.cont [3/16] 0.0, 128
    %313 = vxpose.xlu0.b32.cont [4/16] 0.0, 128
    %314 = vxpose.xlu0.b32.cont [5/16] 0.0, 128
    %315 = vxpose.xlu0.b32.cont [6/16] 0.0, 128
    %316 = vxpose.xlu0.b32.cont [7/16] 0.0, 128
    %317 = vxpose.xlu0.b32.cont [8/16] 0.0, 128
    %318 = vxpose.xlu0.b32.cont [9/16] 0.0, 128
    %319 = vxpose.xlu0.b32.cont [10/16] 0.0, 128
    %320 = vxpose.xlu0.b32.cont [11/16] 0.0, 128
    %321 = vxpose.xlu0.b32.cont [12/16] 0.0, 128
    %322 = vxpose.xlu0.b32.cont [13/16] 0.0, 128
    %323 = vxpose.xlu0.b32.cont [14/16] 0.0, 128
    %324 = vxpose.xlu0.b32.cont [15/16] 0.0, 128
    %325 = vxpose.xlu0.b32.end [16/16] 0.0, 128
    %v326 = vpop.trf.xlu0
    %v327 = vpop.trf.xlu0
    %v328 = vpop.trf.xlu0
    %v329 = vpop.trf.xlu0
    %v330 = vpop.trf.xlu0
    %v331 = vpop.trf.xlu0
    %v332 = vpop.trf.xlu0
    %v333 = vpop.trf.xlu0
    %v334 = vpop.trf.xlu0
    %v335 = vpop.trf.xlu0
    %v336 = vpop.trf.xlu0
    %v337 = vpop.trf.xlu0
    %v338 = vpop.trf.xlu0
    %v339 = vpop.trf.xlu0
    %v340 = vpop.trf.xlu0
    %v341 = vpop.trf.xlu0
    %v343 = vsel %vm60, %v326, 0
    %v346 = vsel %vm60, %v327, 0
    %348 = vmatprep.subr.mxu0 0.0
    %349 = vmatpush1.msra.mxu0 0.0
    %350 = vmatprep.subr.mxu0 0.0
    %351 = vmatpush1.msra.mxu0 0.0
    %352 = vmatprep.subr.mxu0 0.0
    %353 = vmatpush1.msra.mxu0 0.0
    %354 = vmatprep.subr.mxu0 0.0
    %355 = vmatpush1.msra.mxu0 0.0
    %356 = vmatprep.subr.mxu0 0.0
    %357 = vmatpush1.msra.mxu0 0.0
    %358 = vmatprep.subr.mxu0 0.0
    %359 = vmatpush1.msra.mxu0 0.0
    %360 = vmatprep.subr.mxu0 0.0
    %361 = vmatpush1.msra.mxu0 0.0
    %362 = vmatprep.subr.mxu0 0.0
    %363 = vmatpush1.msra.mxu0 0.0
    %364 = vmatprep.subr.mxu0 0.0
    %365 = vmatpush1.msra.mxu0 0.0
    %366 = vmatprep.subr.mxu0 0.0
    %367 = vmatpush1.msra.mxu0 0.0
    %368 = vmatprep.subr.mxu0 0.0
    %369 = vmatpush1.msra.mxu0 0.0
    %370 = vmatprep.subr.mxu0 0.0
    %371 = vmatpush1.msra.mxu0 0.0
    %372 = vmatprep.subr.mxu0 0.0
    %373 = vmatpush1.msra.mxu0 0.0
    %374 = vmatprep.subr.mxu0 0.0
    %375 = vmatpush1.msra.mxu0 0.0
    %376 = vmatprep.subr.mxu0 0.0
    %377 = vmatpush1.msra.mxu0 %v305
    %378 = vmatprep.subr.mxu0 0.0
    %379 = vmatpush1.msra.mxu0 %v304
    %380 = vmatprep.subr.mxu0 0.0
    %381 = vmatpush2.msra.mxu0 0.0
    %382 = vmatprep.subr.mxu0 0.0
    %383 = vmatpush2.msra.mxu0 0.0
    %384 = vmatprep.subr.mxu0 0.0
    %385 = vmatpush2.msra.mxu0 0.0
    %386 = vmatprep.subr.mxu0 0.0
    %387 = vmatpush2.msra.mxu0 0.0
    %388 = vmatprep.subr.mxu0 0.0
    %389 = vmatpush2.msra.mxu0 0.0
    %390 = vmatprep.subr.mxu0 0.0
    %391 = vmatpush2.msra.mxu0 0.0
    %392 = vmatprep.subr.mxu0 0.0
    %393 = vmatpush2.msra.mxu0 0.0
    %394 = vmatprep.subr.mxu0 0.0
    %395 = vmatpush2.msra.mxu0 0.0
    %396 = vmatprep.subr.mxu0 0.0
    %397 = vmatpush2.msra.mxu0 0.0
    %398 = vmatprep.subr.mxu0 0.0
    %399 = vmatpush2.msra.mxu0 0.0
    %400 = vmatprep.subr.mxu0 0.0
    %401 = vmatpush2.msra.mxu0 0.0
    %402 = vmatprep.subr.mxu0 0.0
    %403 = vmatpush2.msra.mxu0 0.0
    %404 = vmatprep.subr.mxu0 0.0
    %405 = vmatpush2.msra.mxu0 0.0
    %406 = vmatprep.subr.mxu0 0.0
    %407 = vmatpush2.msra.mxu0 0.0
    %408 = vmatprep.subr.mxu0 0.0
    %409 = vmatpush2.msra.mxu0 0.0
    %410 = vmatprep.subr.mxu0 0.0
    %411 = vmatpush2.msra.mxu0 0.0
    %412 = vmatprep.mubr.f32.mxu0 0.0
    %413 = vmatmul.mubr.f32.gmra.mxu0 %v343
    %v414 = vpop.f32.mrf.mxu0
    %v415 = vadd.f32 0.0, %v414
    %v416 = vpop.f32.mrf.mxu0
    %417 = vmatprep.mubr.f32.mxu0 0.0
    %418 = vmatmul.mubr.f32.gmra.mxu0 %v346
    %v419 = vpop.f32.mrf.mxu0
    %v420 = vadd.f32 0.0, %v419
    %v421 = vpop.f32.mrf.mxu0
    %422 = vdwg.mxu0
    %423 = vxpose.xlu0.b32.start [1/16] %v56, 128
    %424 = vxpose.xlu0.b32.cont [2/16] %v57, 128
    %425 = vxpose.xlu0.b32.cont [3/16] 0.0, 128
    %426 = vxpose.xlu0.b32.cont [4/16] 0.0, 128
    %427 = vxpose.xlu0.b32.cont [5/16] 0.0, 128
    %428 = vxpose.xlu0.b32.cont [6/16] 0.0, 128
    %429 = vxpose.xlu0.b32.cont [7/16] 0.0, 128
    %430 = vxpose.xlu0.b32.cont [8/16] 0.0, 128
    %431 = vxpose.xlu0.b32.cont [9/16] 0.0, 128
    %432 = vxpose.xlu0.b32.cont [10/16] 0.0, 128
    %433 = vxpose.xlu0.b32.cont [11/16] 0.0, 128
    %434 = vxpose.xlu0.b32.cont [12/16] 0.0, 128
    %435 = vxpose.xlu0.b32.cont [13/16] 0.0, 128
    %436 = vxpose.xlu0.b32.cont [14/16] 0.0, 128
    %437 = vxpose.xlu0.b32.cont [15/16] 0.0, 128
    %438 = vxpose.xlu0.b32.end [16/16] 0.0, 128
    %v439 = vpop.trf.xlu0
    %v440 = vpop.trf.xlu0
    %v441 = vpop.trf.xlu0
    %v442 = vpop.trf.xlu0
    %v443 = vpop.trf.xlu0
    %v444 = vpop.trf.xlu0
    %v445 = vpop.trf.xlu0
    %v446 = vpop.trf.xlu0
    %v447 = vpop.trf.xlu0
    %v448 = vpop.trf.xlu0
    %v449 = vpop.trf.xlu0
    %v450 = vpop.trf.xlu0
    %v451 = vpop.trf.xlu0
    %v452 = vpop.trf.xlu0
    %v453 = vpop.trf.xlu0
    %v454 = vpop.trf.xlu0
    %v456 = vsel %vm60, %v439, 0
    %v459 = vsel %vm60, %v440, 0
    %461 = vmatprep.subr.mxu0 0.0
    %462 = vmatpush1.msra.mxu0 0.0
    %463 = vmatprep.subr.mxu0 0.0
    %464 = vmatpush1.msra.mxu0 0.0
    %465 = vmatprep.subr.mxu0 0.0
    %466 = vmatpush1.msra.mxu0 0.0
    %467 = vmatprep.subr.mxu0 0.0
    %468 = vmatpush1.msra.mxu0 0.0
    %469 = vmatprep.subr.mxu0 0.0
    %470 = vmatpush1.msra.mxu0 0.0
    %471 = vmatprep.subr.mxu0 0.0
    %472 = vmatpush1.msra.mxu0 0.0
    %473 = vmatprep.subr.mxu0 0.0
    %474 = vmatpush1.msra.mxu0 0.0
    %475 = vmatprep.subr.mxu0 0.0
    %476 = vmatpush1.msra.mxu0 0.0
    %477 = vmatprep.subr.mxu0 0.0
    %478 = vmatpush1.msra.mxu0 0.0
    %479 = vmatprep.subr.mxu0 0.0
    %480 = vmatpush1.msra.mxu0 0.0
    %481 = vmatprep.subr.mxu0 0.0
    %482 = vmatpush1.msra.mxu0 0.0
    %483 = vmatprep.subr.mxu0 0.0
    %484 = vmatpush1.msra.mxu0 0.0
    %485 = vmatprep.subr.mxu0 0.0
    %486 = vmatpush1.msra.mxu0 0.0
    %487 = vmatprep.subr.mxu0 0.0
    %488 = vmatpush1.msra.mxu0 0.0
    %489 = vmatprep.subr.mxu0 0.0
    %490 = vmatpush1.msra.mxu0 %v307
    %491 = vmatprep.subr.mxu0 0.0
    %492 = vmatpush1.msra.mxu0 %v306
    %493 = vmatprep.subr.mxu0 0.0
    %494 = vmatpush2.msra.mxu0 0.0
    %495 = vmatprep.subr.mxu0 0.0
    %496 = vmatpush2.msra.mxu0 0.0
    %497 = vmatprep.subr.mxu0 0.0
    %498 = vmatpush2.msra.mxu0 0.0
    %499 = vmatprep.subr.mxu0 0.0
    %500 = vmatpush2.msra.mxu0 0.0
    %501 = vmatprep.subr.mxu0 0.0
    %502 = vmatpush2.msra.mxu0 0.0
    %503 = vmatprep.subr.mxu0 0.0
    %504 = vmatpush2.msra.mxu0 0.0
    %505 = vmatprep.subr.mxu0 0.0
    %506 = vmatpush2.msra.mxu0 0.0
    %507 = vmatprep.subr.mxu0 0.0
    %508 = vmatpush2.msra.mxu0 0.0
    %509 = vmatprep.subr.mxu0 0.0
    %510 = vmatpush2.msra.mxu0 0.0
    %511 = vmatprep.subr.mxu0 0.0
    %512 = vmatpush2.msra.mxu0 0.0
    %513 = vmatprep.subr.mxu0 0.0
    %514 = vmatpush2.msra.mxu0 0.0
    %515 = vmatprep.subr.mxu0 0.0
    %516 = vmatpush2.msra.mxu0 0.0
    %517 = vmatprep.subr.mxu0 0.0
    %518 = vmatpush2.msra.mxu0 0.0
    %519 = vmatprep.subr.mxu0 0.0
    %520 = vmatpush2.msra.mxu0 0.0
    %521 = vmatprep.subr.mxu0 0.0
    %522 = vmatpush2.msra.mxu0 0.0
    %523 = vmatprep.subr.mxu0 0.0
    %524 = vmatpush2.msra.mxu0 0.0
    %525 = vmatprep.mubr.f32.mxu0 0.0
    %526 = vmatmul.mubr.f32.gmra.mxu0 %v456
    %v527 = vpop.f32.mrf.mxu0
    %v528 = vadd.f32 0.0, %v527
    %v529 = vpop.f32.mrf.mxu0
    %530 = vmatprep.mubr.f32.mxu0 0.0
    %531 = vmatmul.mubr.f32.gmra.mxu0 %v459
    %v532 = vpop.f32.mrf.mxu0
    %v533 = vadd.f32 0.0, %v532
    %v534 = vpop.f32.mrf.mxu0
    %535 = vdwg.mxu0
    %536 = vxpose.xlu0.b32.start [1/16] %v58, 128
    %537 = vxpose.xlu0.b32.cont [2/16] %v59, 128
    %538 = vxpose.xlu0.b32.cont [3/16] 0.0, 128
    %539 = vxpose.xlu0.b32.cont [4/16] 0.0, 128
    %540 = vxpose.xlu0.b32.cont [5/16] 0.0, 128
    %541 = vxpose.xlu0.b32.cont [6/16] 0.0, 128
    %542 = vxpose.xlu0.b32.cont [7/16] 0.0, 128
    %543 = vxpose.xlu0.b32.cont [8/16] 0.0, 128
    %544 = vxpose.xlu0.b32.cont [9/16] 0.0, 128
    %545 = vxpose.xlu0.b32.cont [10/16] 0.0, 128
    %546 = vxpose.xlu0.b32.cont [11/16] 0.0, 128
    %547 = vxpose.xlu0.b32.cont [12/16] 0.0, 128
    %548 = vxpose.xlu0.b32.cont [13/16] 0.0, 128
    %549 = vxpose.xlu0.b32.cont [14/16] 0.0, 128
    %550 = vxpose.xlu0.b32.cont [15/16] 0.0, 128
    %551 = vxpose.xlu0.b32.end [16/16] 0.0, 128
    %v552 = vpop.trf.xlu0
    %v553 = vpop.trf.xlu0
    %v554 = vpop.trf.xlu0
    %v555 = vpop.trf.xlu0
    %v556 = vpop.trf.xlu0
    %v557 = vpop.trf.xlu0
    %v558 = vpop.trf.xlu0
    %v559 = vpop.trf.xlu0
    %v560 = vpop.trf.xlu0
    %v561 = vpop.trf.xlu0
    %v562 = vpop.trf.xlu0
    %v563 = vpop.trf.xlu0
    %v564 = vpop.trf.xlu0
    %v565 = vpop.trf.xlu0
    %v566 = vpop.trf.xlu0
    %v567 = vpop.trf.xlu0
    %v569 = vsel %vm60, %v552, 0
    %v572 = vsel %vm60, %v553, 0
    %574 = vmatprep.subr.mxu0 0.0
    %575 = vmatpush1.msra.mxu0 0.0
    %576 = vmatprep.subr.mxu0 0.0
    %577 = vmatpush1.msra.mxu0 0.0
    %578 = vmatprep.subr.mxu0 0.0
    %579 = vmatpush1.msra.mxu0 0.0
    %580 = vmatprep.subr.mxu0 0.0
    %581 = vmatpush1.msra.mxu0 0.0
    %582 = vmatprep.subr.mxu0 0.0
    %583 = vmatpush1.msra.mxu0 0.0
    %584 = vmatprep.subr.mxu0 0.0
    %585 = vmatpush1.msra.mxu0 0.0
    %586 = vmatprep.subr.mxu0 0.0
    %587 = vmatpush1.msra.mxu0 0.0
    %588 = vmatprep.subr.mxu0 0.0
    %589 = vmatpush1.msra.mxu0 0.0
    %590 = vmatprep.subr.mxu0 0.0
    %591 = vmatpush1.msra.mxu0 0.0
    %592 = vmatprep.subr.mxu0 0.0
    %593 = vmatpush1.msra.mxu0 0.0
    %594 = vmatprep.subr.mxu0 0.0
    %595 = vmatpush1.msra.mxu0 0.0
    %596 = vmatprep.subr.mxu0 0.0
    %597 = vmatpush1.msra.mxu0 0.0
    %598 = vmatprep.subr.mxu0 0.0
    %599 = vmatpush1.msra.mxu0 0.0
    %600 = vmatprep.subr.mxu0 0.0
    %601 = vmatpush1.msra.mxu0 0.0
    %602 = vmatprep.subr.mxu0 0.0
    %603 = vmatpush1.msra.mxu0 %v309
    %604 = vmatprep.subr.mxu0 0.0
    %605 = vmatpush1.msra.mxu0 %v308
    %606 = vmatprep.subr.mxu0 0.0
    %607 = vmatpush2.msra.mxu0 0.0
    %608 = vmatprep.subr.mxu0 0.0
    %609 = vmatpush2.msra.mxu0 0.0
    %610 = vmatprep.subr.mxu0 0.0
    %611 = vmatpush2.msra.mxu0 0.0
    %612 = vmatprep.subr.mxu0 0.0
    %613 = vmatpush2.msra.mxu0 0.0
    %614 = vmatprep.subr.mxu0 0.0
    %615 = vmatpush2.msra.mxu0 0.0
    %616 = vmatprep.subr.mxu0 0.0
    %617 = vmatpush2.msra.mxu0 0.0
    %618 = vmatprep.subr.mxu0 0.0
    %619 = vmatpush2.msra.mxu0 0.0
    %620 = vmatprep.subr.mxu0 0.0
    %621 = vmatpush2.msra.mxu0 0.0
    %622 = vmatprep.subr.mxu0 0.0
    %623 = vmatpush2.msra.mxu0 0.0
    %624 = vmatprep.subr.mxu0 0.0
    %625 = vmatpush2.msra.mxu0 0.0
    %626 = vmatprep.subr.mxu0 0.0
    %627 = vmatpush2.msra.mxu0 0.0
    %628 = vmatprep.subr.mxu0 0.0
    %629 = vmatpush2.msra.mxu0 0.0
    %630 = vmatprep.subr.mxu0 0.0
    %631 = vmatpush2.msra.mxu0 0.0
    %632 = vmatprep.subr.mxu0 0.0
    %633 = vmatpush2.msra.mxu0 0.0
    %634 = vmatprep.subr.mxu0 0.0
    %635 = vmatpush2.msra.mxu0 0.0
    %636 = vmatprep.subr.mxu0 0.0
    %637 = vmatpush2.msra.mxu0 0.0
    %638 = vmatprep.mubr.f32.mxu0 0.0
    %639 = vmatmul.mubr.f32.gmra.mxu0 %v569
    %v640 = vpop.f32.mrf.mxu0
    %v641 = vadd.f32 0.0, %v640
    %v642 = vpop.f32.mrf.mxu0
    %643 = vmatprep.mubr.f32.mxu0 0.0
    %644 = vmatmul.mubr.f32.gmra.mxu0 %v572
    %v645 = vpop.f32.mrf.mxu0
    %v646 = vadd.f32 0.0, %v645
    %v647 = vpop.f32.mrf.mxu0
    %648 = vdwg.mxu0
    %649 = vst.msk [vmem:[#allocation7] sm:$0xff] %vm60, %v415
    %650 = vst.msk [vmem:[#allocation7 + $0x8] sm:$0xff] %vm60, %v420
    %651 = vst.msk [vmem:[#allocation7 + $0x10] sm:$0xff] %vm60, %v528
    %652 = vst.msk [vmem:[#allocation7 + $0x18] sm:$0xff] %vm60, %v533
    %653 = vst.msk [vmem:[#allocation7 + $0x20] sm:$0xff] %vm60, %v641
    %654 = vst.msk [vmem:[#allocation7 + $0x28] sm:$0xff] %vm60, %v646
    // Predicated region
    $region18: #{tpu_custom_call.1} parent=1 // pred_check
      _
    $region19: #{tpu_custom_call.1} parent=1 // pred_check_branch
      %656 = sbr.rel (0) target = $region21
    $region20: #{tpu_custom_call.1} parent=1 // pred_region
      %s658 = ssub.s32 768, 768
      %659 = vsyncadd [#allocation4], %s658
      %s660 = sshll.u32 [#allocation7], 4
      %s661 = int_to_ptr.vmem [resolvable:$true] %s660
      %666 = dma.vmem_to_hbm [thread:$0]  %s661, 768, %s2, [#allocation4], 128, 128, 8
    $region21: #{tpu_custom_call.1} parent=1 // pred_fallthru
      _
    // Predicated region
    $region22: #{tpu_custom_call.1} parent=1 // pred_check
      _
    $region23: #{tpu_custom_call.1} parent=1 // pred_check_branch
      %668 = sbr.rel (0) target = $region25
    $region24: #{tpu_custom_call.1} parent=1 // pred_region
      %669 = dma.done [#allocation4], 768
    $region25: #{tpu_custom_call.1} parent=1 // pred_fallthru
      _
    %670 = vsyncpa [#allocation3], 1
    %671 = vsyncpa [#allocation6], 1
    %672 = vsyncpa [#allocation4], 1

</llo_original>
